<compile_context>
chip_gen: v6e
topology: v6e:2x2x1
jax: 0.10.0
libtpu: 0.0.40
codegen_flags: <defaults>
</compile_context>

<pallas_src>
import numpy as np
import jax
import jax.numpy as jnp
from jax.experimental import pallas as pl
from jax.experimental.pallas import tpu as pltpu


def residual_block_kernel(x_ref, w1_ref, w2_ref, o_ref):
    # x_ref:          (tile_b, Cp) activation tile in the INPUT dtype
    # w1_ref, w2_ref: (Cp, Cp) weights, pre-transposed to (in, out) layout,
    #                 compute dtype, VMEM-resident (single-buffered)
    # o_ref:          (tile_b, Cp) output tile
    x = x_ref[...]

    # linear1: x @ W1t -- MXU inputs in the compute dtype, f32 accumulation.
    h = jnp.dot(x.astype(w1_ref.dtype), w1_ref[...],
                preferred_element_type=jnp.float32)
    h = jnp.maximum(h, 0.0)                       # ReLU in f32 (VPU)

    # linear2: feed the MXU in the compute dtype again.
    y = jnp.dot(h.astype(w2_ref.dtype), w2_ref[...],
                preferred_element_type=jnp.float32)

    # Residual add with the ORIGINAL-precision x + final ReLU, both in f32.
    y = y + x.astype(jnp.float32)
    o_ref[...] = jnp.maximum(y, 0.0).astype(o_ref.dtype)


def _round_up(n, m):
    return ((n + m - 1) // m) * m


def _build_call(tile_b, Cp, Bp, out_dtype, vmem_limit, cost,
                single_buffer_weights):
    if single_buffer_weights:
        def w_spec():
            return pl.BlockSpec((Cp, Cp), lambda i: (0, 0),
                                pipeline_mode=pl.Buffered(1))
    else:
        def w_spec():
            return pl.BlockSpec((Cp, Cp), lambda i: (0, 0))

    return pl.pallas_call(
        residual_block_kernel,
        out_shape=jax.ShapeDtypeStruct((Bp, Cp), out_dtype),
        grid_spec=pltpu.PrefetchScalarGridSpec(
            num_scalar_prefetch=0,
            grid=(Bp // tile_b,),
            in_specs=[
                pl.BlockSpec((tile_b, Cp), lambda i: (i, 0)),   # x tile (pipelined)
                w_spec(),                                       # W1 (resident)
                w_spec(),                                       # W2 (resident)
            ],
            out_specs=pl.BlockSpec((tile_b, Cp), lambda i: (i, 0)),
        ),
        compiler_params=pltpu.CompilerParams(
            dimension_semantics=("parallel",),   # batch tiles are independent
            vmem_limit_bytes=vmem_limit,
        ),
        cost_estimate=cost,
    )


def residual_block(x, w1, w2, *, tile_b=None, compute_dtype=None):
    """out = relu(relu(x @ w1.T) @ w2.T + x).

    x:  [B, C] activations.
    w1, w2: [C, C] weights in PyTorch nn.Linear layout (out_features, in_features).
    compute_dtype: dtype fed to the MXU (defaults to x.dtype); accumulation,
    ReLUs and the residual add are always done in f32 with the original x.
    """
    B, C = x.shape
    assert w1.shape == (C, C) and w2.shape == (C, C)

    out_dtype = x.dtype
    cdt = np.dtype(compute_dtype) if compute_dtype is not None else np.dtype(x.dtype)

    x_b = np.dtype(x.dtype).itemsize
    out_b = np.dtype(out_dtype).itemsize
    c_b = cdt.itemsize

    lane = 128
    # Sublane packing of the activation tiles: 8 rows for 4-byte dtypes,
    # 16 for bf16, 32 for 1-byte dtypes.
    sublane = max(8, 32 // x_b)

    # Lane-dense feature width -> full 128-lane stores (no masked vst.msk).
    Cp = _round_up(C, lane)

    # Generation-aware VMEM capacity (64 MiB/core on v7x, 128 MiB on v5e/v6e).
    try:
        vmem_cap = int(pltpu.get_tpu_info().vmem_capacity_bytes)
    except Exception:
        vmem_cap = 64 * 1024 * 1024   # conservative fallback, safe on all chips

    weights_bytes = 2 * Cp * Cp * c_b          # W1 + W2, single-buffered

    def vmem_need(tb):
        return (weights_bytes
                + 2 * tb * Cp * x_b            # double-buffered x tiles
                + 2 * tb * Cp * out_b          # double-buffered out tiles
                + 2 * tb * Cp * 4              # f32 intermediates h, y
                + (8 << 20))                   # headroom

    # Batch tile: multiple of the sublane count, capped at 512 rows, and
    # auto-shrunk until the VMEM budget fits the per-core capacity.
    if tile_b is None:
        tile_b = min(512, _round_up(B, sublane))
    tile_b = max(sublane, _round_up(int(tile_b), sublane))
    while tile_b > sublane and vmem_need(tile_b) > vmem_cap:
        tile_b = max(sublane, _round_up(tile_b // 2, sublane))

    if vmem_need(tile_b) > vmem_cap:
        # Weights cannot stay VMEM-resident even single-buffered at minimal
        # tile_b (large C on v7x first).
        # TODO(synk): K/N-tiled Pallas variant; plain XLA fallback for now.
        h = jnp.maximum(
            jnp.dot(x.astype(cdt), w1.astype(cdt).T,
                    preferred_element_type=jnp.float32), 0.0)
        y = jnp.dot(h.astype(cdt), w2.astype(cdt).T,
                    preferred_element_type=jnp.float32) + x.astype(jnp.float32)
        return jnp.maximum(y, 0.0).astype(out_dtype)

    Bp = _round_up(B, tile_b)                  # ragged batches -> zero padding

    # One-time wrapper-side cast + transpose to (in, out) layout, then zero-pad.
    # Zero padding is exact for this bias-free block: padded rows/lanes stay 0
    # through both matmuls, the residual add and the ReLUs, and are sliced away.
    xc = x
    w1t = w1.astype(cdt).T
    w2t = w2.astype(cdt).T
    if (Bp, Cp) != (B, C):
        xc = jnp.pad(xc, ((0, Bp - B), (0, Cp - C)))
    if Cp != C:
        w1t = jnp.pad(w1t, ((0, Cp - C), (0, Cp - C)))
        w2t = jnp.pad(w2t, ((0, Cp - C), (0, Cp - C)))

    vmem_limit = int(min(max(vmem_need(tile_b), 32 * 1024 * 1024), vmem_cap))

    cost = pl.CostEstimate(
        flops=4 * Bp * Cp * Cp,                      # two CxC matmuls
        transcendentals=0,
        bytes_accessed=Bp * Cp * (x_b + out_b) + 2 * Cp * Cp * c_b)

    try:
        call = _build_call(tile_b, Cp, Bp, out_dtype, vmem_limit, cost,
                           single_buffer_weights=True)
        out = call(xc, w1t, w2t)
    except Exception:
        # Robustness fallback if single-buffered pipeline_mode is unsupported.
        call = _build_call(tile_b, Cp, Bp, out_dtype, vmem_limit, cost,
                           single_buffer_weights=False)
        out = call(xc, w1t, w2t)

    return out[:B, :C]


def residual_block_ref(x, w1, w2):
    """Pure-JAX reference matching the PyTorch module exactly (f32)."""
    h = jnp.maximum(x @ w1.T, 0.0)
    y = h @ w2.T + x
    return jnp.maximum(y, 0.0)


if __name__ == "__main__":
    key = jax.random.PRNGKey(0)
    k_x, k_w1, k_w2 = jax.random.split(key, 3)

    B, C = 8, 32  # small shapes: batch=8, c_dim=32

    x = jax.random.normal(k_x, (B, C), dtype=jnp.float32)
    # Deterministic synthetic weights (shapes from nn.Linear(c_dim, c_dim)).
    bound = 1.0 / float(np.sqrt(C))
    w1 = jax.random.uniform(k_w1, (C, C), jnp.float32, -bound, bound)
    w2 = jax.random.uniform(k_w2, (C, C), jnp.float32, -bound, bound)

    ref = residual_block_ref(x, w1, w2)

    # f32 path (matches PyTorch numerics).
    out = jax.block_until_ready(residual_block(x, w1, w2))
    assert out.shape == (B, C) and out.dtype == jnp.float32
    assert jnp.allclose(out, ref, atol=1e-5, rtol=1e-5), "f32 mismatch vs reference"

    # bf16 mixed-precision path (bf16 MXU inputs, f32 accumulate/ReLU/residual).
    out_bf16 = jax.block_until_ready(
        residual_block(x.astype(jnp.bfloat16), w1, w2,
                       compute_dtype=jnp.bfloat16))
    assert out_bf16.shape == (B, C) and out_bf16.dtype == jnp.bfloat16
    assert jnp.allclose(out_bf16.astype(jnp.float32), ref, atol=5e-2, rtol=5e-2), \
        "bf16 mismatch vs reference"

    print("KERNEL_OK")
</pallas_src>

<mosaic_0001>
module attributes {stable_mosaic.version = 11 : i64} {
  func.func @residual_block_kernel(%arg0: i32, %arg1: memref<8x128xf32, #tpu.memory_space<vmem>>, %arg2: memref<128x128xf32, #tpu.memory_space<vmem>>, %arg3: memref<128x128xf32, #tpu.memory_space<vmem>>, %arg4: memref<8x128xf32, #tpu.memory_space<vmem>>) attributes {dimension_semantics = [#tpu.dimension_semantics<parallel>], iteration_bounds = array<i64: 1>, scalar_prefetch = 0 : i64, scratch_operands = 0 : i64, tpu.core_type = #tpu.core_type<tc>, window_params = [{transform_indices = @transform_0, window_bounds = array<i64: 8, 128>}, {pipeline_mode = #tpu.pipeline_mode<synchronous>, transform_indices = @transform_1, window_bounds = array<i64: 128, 128>}, {pipeline_mode = #tpu.pipeline_mode<synchronous>, transform_indices = @transform_2, window_bounds = array<i64: 128, 128>}, {transform_indices = @transform_3, window_bounds = array<i64: 8, 128>}]} {
    %c0 = arith.constant 0 : index
    %c0_0 = arith.constant 0 : index
    %0 = vector.load %arg1[%c0, %c0_0] : memref<8x128xf32, #tpu.memory_space<vmem>>, vector<8x128xf32>
    %c0_1 = arith.constant 0 : index
    %c0_2 = arith.constant 0 : index
    %1 = vector.load %arg2[%c0_1, %c0_2] : memref<128x128xf32, #tpu.memory_space<vmem>>, vector<128x128xf32>
    %cst = arith.constant dense<0.000000e+00> : vector<8x128xf32>
    %2 = tpu.matmul %0, %1, %cst {dimension_numbers = #tpu.dot_dimension_numbers<[1], [0], [0], [1], [0, 0, 1, 1], [], []>} : vector<8x128xf32>, vector<128x128xf32>, vector<8x128xf32> -> vector<8x128xf32>
    %cst_3 = arith.constant 0.000000e+00 : f32
    %3 = vector.broadcast %cst_3 : f32 to vector<8x128xf32>
    %4 = arith.maximumf %2, %3 : vector<8x128xf32>
    %c0_4 = arith.constant 0 : index
    %c0_5 = arith.constant 0 : index
    %5 = vector.load %arg3[%c0_4, %c0_5] : memref<128x128xf32, #tpu.memory_space<vmem>>, vector<128x128xf32>
    %cst_6 = arith.constant dense<0.000000e+00> : vector<8x128xf32>
    %6 = tpu.matmul %4, %5, %cst_6 {dimension_numbers = #tpu.dot_dimension_numbers<[1], [0], [0], [1], [0, 0, 1, 1], [], []>} : vector<8x128xf32>, vector<128x128xf32>, vector<8x128xf32> -> vector<8x128xf32>
    %7 = arith.addf %6, %0 : vector<8x128xf32>
    %cst_7 = arith.constant 0.000000e+00 : f32
    %8 = vector.broadcast %cst_7 : f32 to vector<8x128xf32>
    %9 = arith.maximumf %7, %8 : vector<8x128xf32>
    %c0_8 = arith.constant 0 : index
    %c0_9 = arith.constant 0 : index
    %10 = vector.load %arg4[%c0_8, %c0_9] : memref<8x128xf32, #tpu.memory_space<vmem>>, vector<8x128xf32>
    tpu.vector_store %arg4[%c0_8, %c0_9], %9 {strides = array<i32>} : memref<8x128xf32, #tpu.memory_space<vmem>>, vector<8x128xf32>,
    return
  }
  func.func @transform_0(%arg0: i32) -> (i32, i32) {
    %c0_i32 = arith.constant 0 : i32
    %c0_i32_0 = arith.constant 0 : i32
    return %arg0, %c0_i32 : i32, i32
  }
  func.func @transform_1(%arg0: i32) -> (i32, i32) {
    %c0_i32 = arith.constant 0 : i32
    %c0_i32_0 = arith.constant 0 : i32
    %c0_i32_1 = arith.constant 0 : i32
    return %c0_i32, %c0_i32_0 : i32, i32
  }
  func.func @transform_2(%arg0: i32) -> (i32, i32) {
    %c0_i32 = arith.constant 0 : i32
    %c0_i32_0 = arith.constant 0 : i32
    %c0_i32_1 = arith.constant 0 : i32
    return %c0_i32, %c0_i32_0 : i32, i32
  }
  func.func @transform_3(%arg0: i32) -> (i32, i32) {
    %c0_i32 = arith.constant 0 : i32
    %c0_i32_0 = arith.constant 0 : i32
    return %arg0, %c0_i32 : i32, i32
  }
}

module attributes {stable_mosaic.version = 11 : i64} {
  func.func @residual_block_kernel(%arg0: i32, %arg1: memref<8x128xf32, #tpu.memory_space<vmem>>, %arg2: memref<128x128xf32, #tpu.memory_space<vmem>>, %arg3: memref<128x128xf32, #tpu.memory_space<vmem>>, %arg4: memref<8x128xf32, #tpu.memory_space<vmem>>) attributes {dimension_semantics = [#tpu.dimension_semantics<parallel>], iteration_bounds = array<i64: 1>, scalar_prefetch = 0 : i64, scratch_operands = 0 : i64, tpu.core_type = #tpu.core_type<tc>, window_params = [{transform_indices = @transform_0, window_bounds = array<i64: 8, 128>}, {pipeline_mode = #tpu.pipeline_mode<synchronous>, transform_indices = @transform_1, window_bounds = array<i64: 128, 128>}, {pipeline_mode = #tpu.pipeline_mode<synchronous>, transform_indices = @transform_2, window_bounds = array<i64: 128, 128>}, {transform_indices = @transform_3, window_bounds = array<i64: 8, 128>}]} {
    %c0 = arith.constant 0 : index
    %c0_0 = arith.constant 0 : index
    %0 = vector.load %arg1[%c0, %c0_0] : memref<8x128xf32, #tpu.memory_space<vmem>>, vector<8x128xf32>
    %c0_1 = arith.constant 0 : index
    %c0_2 = arith.constant 0 : index
    %1 = vector.load %arg2[%c0_1, %c0_2] : memref<128x128xf32, #tpu.memory_space<vmem>>, vector<128x128xf32>
    %cst = arith.constant dense<0.000000e+00> : vector<8x128xf32>
    %2 = tpu.matmul %0, %1, %cst {dimension_numbers = #tpu.dot_dimension_numbers<[1], [0], [0], [1], [0, 0, 1, 1], [], []>} : vector<8x128xf32>, vector<128x128xf32>, vector<8x128xf32> -> vector<8x128xf32>
    %cst_3 = arith.constant 0.000000e+00 : f32
    %3 = vector.broadcast %cst_3 : f32 to vector<8x128xf32>
    %4 = arith.maximumf %2, %3 : vector<8x128xf32>
    %c0_4 = arith.constant 0 : index
    %c0_5 = arith.constant 0 : index
    %5 = vector.load %arg3[%c0_4, %c0_5] : memref<128x128xf32, #tpu.memory_space<vmem>>, vector<128x128xf32>
    %cst_6 = arith.constant dense<0.000000e+00> : vector<8x128xf32>
    %6 = tpu.matmul %4, %5, %cst_6 {dimension_numbers = #tpu.dot_dimension_numbers<[1], [0], [0], [1], [0, 0, 1, 1], [], []>} : vector<8x128xf32>, vector<128x128xf32>, vector<8x128xf32> -> vector<8x128xf32>
    %7 = arith.addf %6, %0 : vector<8x128xf32>
    %cst_7 = arith.constant 0.000000e+00 : f32
    %8 = vector.broadcast %cst_7 : f32 to vector<8x128xf32>
    %9 = arith.maximumf %7, %8 : vector<8x128xf32>
    %c0_8 = arith.constant 0 : index
    %c0_9 = arith.constant 0 : index
    %10 = vector.load %arg4[%c0_8, %c0_9] : memref<8x128xf32, #tpu.memory_space<vmem>>, vector<8x128xf32>
    tpu.vector_store %arg4[%c0_8, %c0_9], %9 {strides = array<i32>} : memref<8x128xf32, #tpu.memory_space<vmem>>, vector<8x128xf32>,
    return
  }
  func.func @transform_0(%arg0: i32) -> (i32, i32) {
    %c0_i32 = arith.constant 0 : i32
    %c0_i32_0 = arith.constant 0 : i32
    return %arg0, %c0_i32 : i32, i32
  }
  func.func @transform_1(%arg0: i32) -> (i32, i32) {
    %c0_i32 = arith.constant 0 : i32
    %c0_i32_0 = arith.constant 0 : i32
    %c0_i32_1 = arith.constant 0 : i32
    return %c0_i32, %c0_i32_0 : i32, i32
  }
  func.func @transform_2(%arg0: i32) -> (i32, i32) {
    %c0_i32 = arith.constant 0 : i32
    %c0_i32_0 = arith.constant 0 : i32
    %c0_i32_1 = arith.constant 0 : i32
    return %c0_i32, %c0_i32_0 : i32, i32
  }
  func.func @transform_3(%arg0: i32) -> (i32, i32) {
    %c0_i32 = arith.constant 0 : i32
    %c0_i32_0 = arith.constant 0 : i32
    return %arg0, %c0_i32 : i32, i32
  }
}

</mosaic_0001>

<llo_original>
// kernel: tpu_custom_call.1
$region0: #{tpu_custom_call.1}
  #allocation0 [shape = 'u32[]', space=smem, size = 0x4, offset = 0x4, fixed_abs, tag = 'smem constant byte address 0x4 - core index']
  #allocation1 [shape = 'u32[144,128]{1,0:T(1,128)}', space=vmem, size = 0x12000, scoped, tag = 'internal scratch']
  %s0 = inlined_call_operand.hbm [shape: f32[8,128], index: 0, kind: input, shape index: {}]
  %s1 = inlined_call_operand.hbm [shape: f32[128,128], index: 1, kind: input, shape index: {}]
  %s2 = inlined_call_operand.hbm [shape: f32[128,128], index: 2, kind: input, shape index: {}]
  %s3 = inlined_call_operand.hbm [shape: f32[8,128], index: 3, kind: output, shape index: {}]
  %s4 = sld [smem:[#allocation0]]
  $region34: #{tpu_custom_call.1} parent=0
    _
  %s6 = ssub.s32 1, %s4
  %s7 = scalar_select 0, %s6, %s4
  $region1: #{tpu_custom_call.1} parent=0
    #allocation2 [shape = 'u8[4096]{0}', space=vmem, size = 0x1000, scoped, tag = 'input window, operand 0, single buffered']
    #allocation3 [shape = 's32[1]{0}', space=sflag, size = 0x4, scoped, tag = 'scoped memory for tpu_custom_call.1']
    #allocation4 [shape = 's32[1]{0}', space=sflag, size = 0x4, scoped, tag = 'scoped memory for tpu_custom_call.1']
    #allocation5 [shape = 'u8[65536]{0}', space=vmem, size = 0x10000, scoped, tag = 'input window, operand 1, single buffered']
    #allocation6 [shape = 's32[1]{0}', space=sflag, size = 0x4, scoped, tag = 'scoped memory for tpu_custom_call.1']
    #allocation7 [shape = 'u8[65536]{0}', space=vmem, size = 0x10000, scoped, tag = 'input window, operand 2, single buffered']
    #allocation8 [shape = 'u8[4096]{0}', space=vmem, size = 0x1000, scoped, tag = 'output window, operand 0, single buffered']
    %8 = vsyncpa [#allocation3], 0
    %9 = vsyncpa [#allocation6], 0
    %10 = vsyncpa [#allocation4], 0
    // Predicated region
    $region2: #{tpu_custom_call.1} parent=1 // pred_check
      _
    $region3: #{tpu_custom_call.1} parent=1 // pred_check_branch
      %12 = sbr.rel (0) target = $region5
    $region4: #{tpu_custom_call.1} parent=1 // pred_region
      %s14 = ssub.s32 128, 128
      %15 = vsyncadd [#allocation3], %s14
      %s17 = sshll.u32 [#allocation2], 4
      %s18 = int_to_ptr.vmem [resolvable:$true] %s17
      %20 = dma.hbm_to_vmem [thread:$0]  %s0, 128, %s18, [#allocation3]
    $region5: #{tpu_custom_call.1} parent=1 // pred_fallthru
      _
    // Predicated region
    $region6: #{tpu_custom_call.1} parent=1 // pred_check
      _
    $region7: #{tpu_custom_call.1} parent=1 // pred_check_branch
      %22 = sbr.rel (0) target = $region9
    $region8: #{tpu_custom_call.1} parent=1 // pred_region
      %s24 = ssub.s32 2048, 2048
      %25 = vsyncadd [#allocation6], %s24
      %s26 = sshll.u32 [#allocation5], 4
      %s27 = int_to_ptr.vmem [resolvable:$true] %s26
      %32 = dma.hbm_to_vmem [thread:$0]  %s1, 2048, %s27, [#allocation6], 128, 128, 8
    $region9: #{tpu_custom_call.1} parent=1 // pred_fallthru
      _
    // Predicated region
    $region10: #{tpu_custom_call.1} parent=1 // pred_check
      _
    $region11: #{tpu_custom_call.1} parent=1 // pred_check_branch
      %34 = sbr.rel (0) target = $region13
    $region12: #{tpu_custom_call.1} parent=1 // pred_region
      %s36 = ssub.s32 2048, 2048
      %37 = vsyncadd [#allocation6], %s36
      %s38 = sshll.u32 [#allocation7], 4
      %s39 = int_to_ptr.vmem [resolvable:$true] %s38
      %44 = dma.hbm_to_vmem [thread:$0]  %s2, 2048, %s39, [#allocation6], 128, 128, 8
    $region13: #{tpu_custom_call.1} parent=1 // pred_fallthru
      _
    // Predicated region
    $region14: #{tpu_custom_call.1} parent=1 // pred_check
      _
    $region15: #{tpu_custom_call.1} parent=1 // pred_check_branch
      %46 = sbr.rel (0) target = $region17
    $region16: #{tpu_custom_call.1} parent=1 // pred_region
      %47 = dma.done [#allocation3], 128
    $region17: #{tpu_custom_call.1} parent=1 // pred_fallthru
      _
    // Predicated region
    $region18: #{tpu_custom_call.1} parent=1 // pred_check
      _
    $region19: #{tpu_custom_call.1} parent=1 // pred_check_branch
      %49 = sbr.rel (0) target = $region21
    $region20: #{tpu_custom_call.1} parent=1 // pred_region
      %50 = dma.done [#allocation6], 2048
    $region21: #{tpu_custom_call.1} parent=1 // pred_fallthru
      _
    // Predicated region
    $region22: #{tpu_custom_call.1} parent=1 // pred_check
      _
    $region23: #{tpu_custom_call.1} parent=1 // pred_check_branch
      %52 = sbr.rel (0) target = $region25
    $region24: #{tpu_custom_call.1} parent=1 // pred_region
      %53 = dma.done [#allocation6], 2048
    $region25: #{tpu_custom_call.1} parent=1 // pred_fallthru
      _
    %v54 = vld [vmem:[#allocation2] sm:$0xff]
    %v55 = vld [vmem:[#allocation5] sm:$0xff]
    %v56 = vld [vmem:[#allocation5 + $0x8] sm:$0xff]
    %v57 = vld [vmem:[#allocation5 + $0x10] sm:$0xff]
    %v58 = vld [vmem:[#allocation5 + $0x18] sm:$0xff]
    %v59 = vld [vmem:[#allocation5 + $0x20] sm:$0xff]
    %v60 = vld [vmem:[#allocation5 + $0x28] sm:$0xff]
    %v61 = vld [vmem:[#allocation5 + $0x30] sm:$0xff]
    %v62 = vld [vmem:[#allocation5 + $0x38] sm:$0xff]
    %v63 = vld [vmem:[#allocation5 + $0x40] sm:$0xff]
    %v64 = vld [vmem:[#allocation5 + $0x48] sm:$0xff]
    %v65 = vld [vmem:[#allocation5 + $0x50] sm:$0xff]
    %v66 = vld [vmem:[#allocation5 + $0x58] sm:$0xff]
    %v67 = vld [vmem:[#allocation5 + $0x60] sm:$0xff]
    %v68 = vld [vmem:[#allocation5 + $0x68] sm:$0xff]
    %v69 = vld [vmem:[#allocation5 + $0x70] sm:$0xff]
    %v70 = vld [vmem:[#allocation5 + $0x78] sm:$0xff]
    %71 = vmatprep.subr.mxu0 0.0
    %72 = vmatpush1.msra.mxu0 %v70
    %73 = vmatprep.subr.mxu0 0.0
    %74 = vmatpush1.msra.mxu0 %v69
    %75 = vmatprep.subr.mxu0 0.0
    %76 = vmatpush1.msra.mxu0 %v68
    %77 = vmatprep.subr.mxu0 0.0
    %78 = vmatpush1.msra.mxu0 %v67
    %79 = vmatprep.subr.mxu0 0.0
    %80 = vmatpush1.msra.mxu0 %v66
    %81 = vmatprep.subr.mxu0 0.0
    %82 = vmatpush1.msra.mxu0 %v65
    %83 = vmatprep.subr.mxu0 0.0
    %84 = vmatpush1.msra.mxu0 %v64
    %85 = vmatprep.subr.mxu0 0.0
    %86 = vmatpush1.msra.mxu0 %v63
    %87 = vmatprep.subr.mxu0 0.0
    %88 = vmatpush1.msra.mxu0 %v62
    %89 = vmatprep.subr.mxu0 0.0
    %90 = vmatpush1.msra.mxu0 %v61
    %91 = vmatprep.subr.mxu0 0.0
    %92 = vmatpush1.msra.mxu0 %v60
    %93 = vmatprep.subr.mxu0 0.0
    %94 = vmatpush1.msra.mxu0 %v59
    %95 = vmatprep.subr.mxu0 0.0
    %96 = vmatpush1.msra.mxu0 %v58
    %97 = vmatprep.subr.mxu0 0.0
    %98 = vmatpush1.msra.mxu0 %v57
    %99 = vmatprep.subr.mxu0 0.0
    %100 = vmatpush1.msra.mxu0 %v56
    %101 = vmatprep.subr.mxu0 0.0
    %102 = vmatpush1.msra.mxu0 %v55
    %103 = vmatprep.subr.mxu0 0.0
    %104 = vmatpush2.msra.mxu0 0.0
    %105 = vmatprep.subr.mxu0 0.0
    %106 = vmatpush2.msra.mxu0 0.0
    %107 = vmatprep.subr.mxu0 0.0
    %108 = vmatpush2.msra.mxu0 0.0
    %109 = vmatprep.subr.mxu0 0.0
    %110 = vmatpush2.msra.mxu0 0.0
    %111 = vmatprep.subr.mxu0 0.0
    %112 = vmatpush2.msra.mxu0 0.0
    %113 = vmatprep.subr.mxu0 0.0
    %114 = vmatpush2.msra.mxu0 0.0
    %115 = vmatprep.subr.mxu0 0.0
    %116 = vmatpush2.msra.mxu0 0.0
    %117 = vmatprep.subr.mxu0 0.0
    %118 = vmatpush2.msra.mxu0 0.0
    %119 = vmatprep.subr.mxu0 0.0
    %120 = vmatpush2.msra.mxu0 0.0
    %121 = vmatprep.subr.mxu0 0.0
    %122 = vmatpush2.msra.mxu0 0.0
    %123 = vmatprep.subr.mxu0 0.0
    %124 = vmatpush2.msra.mxu0 0.0
    %125 = vmatprep.subr.mxu0 0.0
    %126 = vmatpush2.msra.mxu0 0.0
    %127 = vmatprep.subr.mxu0 0.0
    %128 = vmatpush2.msra.mxu0 0.0
    %129 = vmatprep.subr.mxu0 0.0
    %130 = vmatpush2.msra.mxu0 0.0
    %131 = vmatprep.subr.mxu0 0.0
    %132 = vmatpush2.msra.mxu0 0.0
    %133 = vmatprep.subr.mxu0 0.0
    %134 = vmatpush2.msra.mxu0 0.0
    %135 = vmatprep.mubr.f32.mxu0 0.0
    %136 = vmatmul.mubr.f32.gmra.mxu0 %v54
    %v137 = vpop.f32.mrf.mxu0
    %v138 = vadd.f32 0.0, %v137
    %v139 = vpop.f32.mrf.mxu0
    %140 = vdwg.mxu0
    %v141 = vmax.f32 %v138, 0.0
    %v142 = vld [vmem:[#allocation7] sm:$0xff]
    %v143 = vld [vmem:[#allocation7 + $0x8] sm:$0xff]
    %v144 = vld [vmem:[#allocation7 + $0x10] sm:$0xff]
    %v145 = vld [vmem:[#allocation7 + $0x18] sm:$0xff]
    %v146 = vld [vmem:[#allocation7 + $0x20] sm:$0xff]
    %v147 = vld [vmem:[#allocation7 + $0x28] sm:$0xff]
    %v148 = vld [vmem:[#allocation7 + $0x30] sm:$0xff]
    %v149 = vld [vmem:[#allocation7 + $0x38] sm:$0xff]
    %v150 = vld [vmem:[#allocation7 + $0x40] sm:$0xff]
    %v151 = vld [vmem:[#allocation7 + $0x48] sm:$0xff]
    %v152 = vld [vmem:[#allocation7 + $0x50] sm:$0xff]
    %v153 = vld [vmem:[#allocation7 + $0x58] sm:$0xff]
    %v154 = vld [vmem:[#allocation7 + $0x60] sm:$0xff]
    %v155 = vld [vmem:[#allocation7 + $0x68] sm:$0xff]
    %v156 = vld [vmem:[#allocation7 + $0x70] sm:$0xff]
    %v157 = vld [vmem:[#allocation7 + $0x78] sm:$0xff]
    %158 = vmatprep.subr.mxu0 0.0
    %159 = vmatpush1.msra.mxu0 %v157
    %160 = vmatprep.subr.mxu0 0.0
    %161 = vmatpush1.msra.mxu0 %v156
    %162 = vmatprep.subr.mxu0 0.0
    %163 = vmatpush1.msra.mxu0 %v155
    %164 = vmatprep.subr.mxu0 0.0
    %165 = vmatpush1.msra.mxu0 %v154
    %166 = vmatprep.subr.mxu0 0.0
    %167 = vmatpush1.msra.mxu0 %v153
    %168 = vmatprep.subr.mxu0 0.0
    %169 = vmatpush1.msra.mxu0 %v152
    %170 = vmatprep.subr.mxu0 0.0
    %171 = vmatpush1.msra.mxu0 %v151
    %172 = vmatprep.subr.mxu0 0.0
    %173 = vmatpush1.msra.mxu0 %v150
    %174 = vmatprep.subr.mxu0 0.0
    %175 = vmatpush1.msra.mxu0 %v149
    %176 = vmatprep.subr.mxu0 0.0
    %177 = vmatpush1.msra.mxu0 %v148
    %178 = vmatprep.subr.mxu0 0.0
    %179 = vmatpush1.msra.mxu0 %v147
    %180 = vmatprep.subr.mxu0 0.0
    %181 = vmatpush1.msra.mxu0 %v146
    %182 = vmatprep.subr.mxu0 0.0
    %183 = vmatpush1.msra.mxu0 %v145
    %184 = vmatprep.subr.mxu0 0.0
    %185 = vmatpush1.msra.mxu0 %v144
    %186 = vmatprep.subr.mxu0 0.0
    %187 = vmatpush1.msra.mxu0 %v143
    %188 = vmatprep.subr.mxu0 0.0
    %189 = vmatpush1.msra.mxu0 %v142
    %190 = vmatprep.subr.mxu0 0.0
    %191 = vmatpush2.msra.mxu0 0.0
    %192 = vmatprep.subr.mxu0 0.0
    %193 = vmatpush2.msra.mxu0 0.0
    %194 = vmatprep.subr.mxu0 0.0
    %195 = vmatpush2.msra.mxu0 0.0
    %196 = vmatprep.subr.mxu0 0.0
    %197 = vmatpush2.msra.mxu0 0.0
    %198 = vmatprep.subr.mxu0 0.0
    %199 = vmatpush2.msra.mxu0 0.0
    %200 = vmatprep.subr.mxu0 0.0
    %201 = vmatpush2.msra.mxu0 0.0
    %202 = vmatprep.subr.mxu0 0.0
    %203 = vmatpush2.msra.mxu0 0.0
    %204 = vmatprep.subr.mxu0 0.0
    %205 = vmatpush2.msra.mxu0 0.0
    %206 = vmatprep.subr.mxu0 0.0
    %207 = vmatpush2.msra.mxu0 0.0
    %208 = vmatprep.subr.mxu0 0.0
    %209 = vmatpush2.msra.mxu0 0.0
    %210 = vmatprep.subr.mxu0 0.0
    %211 = vmatpush2.msra.mxu0 0.0
    %212 = vmatprep.subr.mxu0 0.0
    %213 = vmatpush2.msra.mxu0 0.0
    %214 = vmatprep.subr.mxu0 0.0
    %215 = vmatpush2.msra.mxu0 0.0
    %216 = vmatprep.subr.mxu0 0.0
    %217 = vmatpush2.msra.mxu0 0.0
    %218 = vmatprep.subr.mxu0 0.0
    %219 = vmatpush2.msra.mxu0 0.0
    %220 = vmatprep.subr.mxu0 0.0
    %221 = vmatpush2.msra.mxu0 0.0
    %222 = vmatprep.mubr.f32.mxu0 0.0
    %223 = vmatmul.mubr.f32.gmra.mxu0 %v141
    %v224 = vpop.f32.mrf.mxu0
    %v225 = vadd.f32 %v54, %v224
    %v226 = vpop.f32.mrf.mxu0
    %227 = vdwg.mxu0
    %v228 = vmax.f32 %v225, 0.0
    %229 = vst [vmem:[#allocation8] sm:$0xff] %v228
    // Predicated region
    $region26: #{tpu_custom_call.1} parent=1 // pred_check
      _
    $region27: #{tpu_custom_call.1} parent=1 // pred_check_branch
      %231 = sbr.rel (0) target = $region29
    $region28: #{tpu_custom_call.1} parent=1 // pred_region
      %s233 = ssub.s32 128, 128
      %234 = vsyncadd [#allocation4], %s233
      %s236 = sshll.u32 [#allocation8], 4
      %s237 = int_to_ptr.vmem [resolvable:$true] %s236
      %239 = dma.vmem_to_hbm [thread:$0]  %s237, 128, %s3, [#allocation4]
    $region29: #{tpu_custom_call.1} parent=1 // pred_fallthru
      _
    // Predicated region
    $region30: #{tpu_custom_call.1} parent=1 // pred_check
      _
    $region31: #{tpu_custom_call.1} parent=1 // pred_check_branch
      %241 = sbr.rel (0) target = $region33
    $region32: #{tpu_custom_call.1} parent=1 // pred_region
      %242 = dma.done [#allocation4], 128
    $region33: #{tpu_custom_call.1} parent=1 // pred_fallthru
      _
    %243 = vsyncpa [#allocation3], 1
    %244 = vsyncpa [#allocation6], 1
    %245 = vsyncpa [#allocation4], 1

// kernel: tpu_custom_call.1
$region0: #{tpu_custom_call.1}
  #allocation0 [shape = 'u32[]', space=smem, size = 0x4, offset = 0x4, fixed_abs, tag = 'smem constant byte address 0x4 - core index']
  #allocation1 [shape = 'u32[144,128]{1,0:T(1,128)}', space=vmem, size = 0x12000, scoped, tag = 'internal scratch']
  %s0 = inlined_call_operand.hbm [shape: f32[8,128], index: 0, kind: input, shape index: {}]
  %s1 = inlined_call_operand.hbm [shape: f32[128,128], index: 1, kind: input, shape index: {}]
  %s2 = inlined_call_operand.hbm [shape: f32[128,128], index: 2, kind: input, shape index: {}]
  %s3 = inlined_call_operand.hbm [shape: f32[8,128], index: 3, kind: output, shape index: {}]
  %s4 = sld [smem:[#allocation0]]
  $region34: #{tpu_custom_call.1} parent=0
    _
  %s6 = ssub.s32 1, %s4
  %s7 = scalar_select 0, %s6, %s4
  $region1: #{tpu_custom_call.1} parent=0
    #allocation2 [shape = 'u8[4096]{0}', space=vmem, size = 0x1000, scoped, tag = 'input window, operand 0, single buffered']
    #allocation3 [shape = 's32[1]{0}', space=sflag, size = 0x4, scoped, tag = 'scoped memory for tpu_custom_call.1']
    #allocation4 [shape = 's32[1]{0}', space=sflag, size = 0x4, scoped, tag = 'scoped memory for tpu_custom_call.1']
    #allocation5 [shape = 'u8[65536]{0}', space=vmem, size = 0x10000, scoped, tag = 'input window, operand 1, single buffered']
    #allocation6 [shape = 's32[1]{0}', space=sflag, size = 0x4, scoped, tag = 'scoped memory for tpu_custom_call.1']
    #allocation7 [shape = 'u8[65536]{0}', space=vmem, size = 0x10000, scoped, tag = 'input window, operand 2, single buffered']
    #allocation8 [shape = 'u8[4096]{0}', space=vmem, size = 0x1000, scoped, tag = 'output window, operand 0, single buffered']
    %8 = vsyncpa [#allocation3], 0
    %9 = vsyncpa [#allocation6], 0
    %10 = vsyncpa [#allocation4], 0
    // Predicated region
    $region2: #{tpu_custom_call.1} parent=1 // pred_check
      _
    $region3: #{tpu_custom_call.1} parent=1 // pred_check_branch
      %12 = sbr.rel (0) target = $region5
    $region4: #{tpu_custom_call.1} parent=1 // pred_region
      %s14 = ssub.s32 128, 128
      %15 = vsyncadd [#allocation3], %s14
      %s17 = sshll.u32 [#allocation2], 4
      %s18 = int_to_ptr.vmem [resolvable:$true] %s17
      %20 = dma.hbm_to_vmem [thread:$0]  %s0, 128, %s18, [#allocation3]
    $region5: #{tpu_custom_call.1} parent=1 // pred_fallthru
      _
    // Predicated region
    $region6: #{tpu_custom_call.1} parent=1 // pred_check
      _
    $region7: #{tpu_custom_call.1} parent=1 // pred_check_branch
      %22 = sbr.rel (0) target = $region9
    $region8: #{tpu_custom_call.1} parent=1 // pred_region
      %s24 = ssub.s32 2048, 2048
      %25 = vsyncadd [#allocation6], %s24
      %s26 = sshll.u32 [#allocation5], 4
      %s27 = int_to_ptr.vmem [resolvable:$true] %s26
      %32 = dma.hbm_to_vmem [thread:$0]  %s1, 2048, %s27, [#allocation6], 128, 128, 8
    $region9: #{tpu_custom_call.1} parent=1 // pred_fallthru
      _
    // Predicated region
    $region10: #{tpu_custom_call.1} parent=1 // pred_check
      _
    $region11: #{tpu_custom_call.1} parent=1 // pred_check_branch
      %34 = sbr.rel (0) target = $region13
    $region12: #{tpu_custom_call.1} parent=1 // pred_region
      %s36 = ssub.s32 2048, 2048
      %37 = vsyncadd [#allocation6], %s36
      %s38 = sshll.u32 [#allocation7], 4
      %s39 = int_to_ptr.vmem [resolvable:$true] %s38
      %44 = dma.hbm_to_vmem [thread:$0]  %s2, 2048, %s39, [#allocation6], 128, 128, 8
    $region13: #{tpu_custom_call.1} parent=1 // pred_fallthru
      _
    // Predicated region
    $region14: #{tpu_custom_call.1} parent=1 // pred_check
      _
    $region15: #{tpu_custom_call.1} parent=1 // pred_check_branch
      %46 = sbr.rel (0) target = $region17
    $region16: #{tpu_custom_call.1} parent=1 // pred_region
      %47 = dma.done [#allocation3], 128
    $region17: #{tpu_custom_call.1} parent=1 // pred_fallthru
      _
    // Predicated region
    $region18: #{tpu_custom_call.1} parent=1 // pred_check
      _
    $region19: #{tpu_custom_call.1} parent=1 // pred_check_branch
      %49 = sbr.rel (0) target = $region21
    $region20: #{tpu_custom_call.1} parent=1 // pred_region
      %50 = dma.done [#allocation6], 2048
    $region21: #{tpu_custom_call.1} parent=1 // pred_fallthru
      _
    // Predicated region
    $region22: #{tpu_custom_call.1} parent=1 // pred_check
      _
    $region23: #{tpu_custom_call.1} parent=1 // pred_check_branch
      %52 = sbr.rel (0) target = $region25
    $region24: #{tpu_custom_call.1} parent=1 // pred_region
      %53 = dma.done [#allocation6], 2048
    $region25: #{tpu_custom_call.1} parent=1 // pred_fallthru
      _
    %v54 = vld [vmem:[#allocation2] sm:$0xff]
    %v55 = vld [vmem:[#allocation5] sm:$0xff]
    %v56 = vld [vmem:[#allocation5 + $0x8] sm:$0xff]
    %v57 = vld [vmem:[#allocation5 + $0x10] sm:$0xff]
    %v58 = vld [vmem:[#allocation5 + $0x18] sm:$0xff]
    %v59 = vld [vmem:[#allocation5 + $0x20] sm:$0xff]
    %v60 = vld [vmem:[#allocation5 + $0x28] sm:$0xff]
    %v61 = vld [vmem:[#allocation5 + $0x30] sm:$0xff]
    %v62 = vld [vmem:[#allocation5 + $0x38] sm:$0xff]
    %v63 = vld [vmem:[#allocation5 + $0x40] sm:$0xff]
    %v64 = vld [vmem:[#allocation5 + $0x48] sm:$0xff]
    %v65 = vld [vmem:[#allocation5 + $0x50] sm:$0xff]
    %v66 = vld [vmem:[#allocation5 + $0x58] sm:$0xff]
    %v67 = vld [vmem:[#allocation5 + $0x60] sm:$0xff]
    %v68 = vld [vmem:[#allocation5 + $0x68] sm:$0xff]
    %v69 = vld [vmem:[#allocation5 + $0x70] sm:$0xff]
    %v70 = vld [vmem:[#allocation5 + $0x78] sm:$0xff]
    %71 = vmatprep.subr.mxu0 0.0
    %72 = vmatpush1.msra.mxu0 %v70
    %73 = vmatprep.subr.mxu0 0.0
    %74 = vmatpush1.msra.mxu0 %v69
    %75 = vmatprep.subr.mxu0 0.0
    %76 = vmatpush1.msra.mxu0 %v68
    %77 = vmatprep.subr.mxu0 0.0
    %78 = vmatpush1.msra.mxu0 %v67
    %79 = vmatprep.subr.mxu0 0.0
    %80 = vmatpush1.msra.mxu0 %v66
    %81 = vmatprep.subr.mxu0 0.0
    %82 = vmatpush1.msra.mxu0 %v65
    %83 = vmatprep.subr.mxu0 0.0
    %84 = vmatpush1.msra.mxu0 %v64
    %85 = vmatprep.subr.mxu0 0.0
    %86 = vmatpush1.msra.mxu0 %v63
    %87 = vmatprep.subr.mxu0 0.0
    %88 = vmatpush1.msra.mxu0 %v62
    %89 = vmatprep.subr.mxu0 0.0
    %90 = vmatpush1.msra.mxu0 %v61
    %91 = vmatprep.subr.mxu0 0.0
    %92 = vmatpush1.msra.mxu0 %v60
    %93 = vmatprep.subr.mxu0 0.0
    %94 = vmatpush1.msra.mxu0 %v59
    %95 = vmatprep.subr.mxu0 0.0
    %96 = vmatpush1.msra.mxu0 %v58
    %97 = vmatprep.subr.mxu0 0.0
    %98 = vmatpush1.msra.mxu0 %v57
    %99 = vmatprep.subr.mxu0 0.0
    %100 = vmatpush1.msra.mxu0 %v56
    %101 = vmatprep.subr.mxu0 0.0
    %102 = vmatpush1.msra.mxu0 %v55
    %103 = vmatprep.subr.mxu0 0.0
    %104 = vmatpush2.msra.mxu0 0.0
    %105 = vmatprep.subr.mxu0 0.0
    %106 = vmatpush2.msra.mxu0 0.0
    %107 = vmatprep.subr.mxu0 0.0
    %108 = vmatpush2.msra.mxu0 0.0
    %109 = vmatprep.subr.mxu0 0.0
    %110 = vmatpush2.msra.mxu0 0.0
    %111 = vmatprep.subr.mxu0 0.0
    %112 = vmatpush2.msra.mxu0 0.0
    %113 = vmatprep.subr.mxu0 0.0
    %114 = vmatpush2.msra.mxu0 0.0
    %115 = vmatprep.subr.mxu0 0.0
    %116 = vmatpush2.msra.mxu0 0.0
    %117 = vmatprep.subr.mxu0 0.0
    %118 = vmatpush2.msra.mxu0 0.0
    %119 = vmatprep.subr.mxu0 0.0
    %120 = vmatpush2.msra.mxu0 0.0
    %121 = vmatprep.subr.mxu0 0.0
    %122 = vmatpush2.msra.mxu0 0.0
    %123 = vmatprep.subr.mxu0 0.0
    %124 = vmatpush2.msra.mxu0 0.0
    %125 = vmatprep.subr.mxu0 0.0
    %126 = vmatpush2.msra.mxu0 0.0
    %127 = vmatprep.subr.mxu0 0.0
    %128 = vmatpush2.msra.mxu0 0.0
    %129 = vmatprep.subr.mxu0 0.0
    %130 = vmatpush2.msra.mxu0 0.0
    %131 = vmatprep.subr.mxu0 0.0
    %132 = vmatpush2.msra.mxu0 0.0
    %133 = vmatprep.subr.mxu0 0.0
    %134 = vmatpush2.msra.mxu0 0.0
    %135 = vmatprep.mubr.f32.mxu0 0.0
    %136 = vmatmul.mubr.f32.gmra.mxu0 %v54
    %v137 = vpop.f32.mrf.mxu0
    %v138 = vadd.f32 0.0, %v137
    %v139 = vpop.f32.mrf.mxu0
    %140 = vdwg.mxu0
    %v141 = vmax.f32 %v138, 0.0
    %v142 = vld [vmem:[#allocation7] sm:$0xff]
    %v143 = vld [vmem:[#allocation7 + $0x8] sm:$0xff]
    %v144 = vld [vmem:[#allocation7 + $0x10] sm:$0xff]
    %v145 = vld [vmem:[#allocation7 + $0x18] sm:$0xff]
    %v146 = vld [vmem:[#allocation7 + $0x20] sm:$0xff]
    %v147 = vld [vmem:[#allocation7 + $0x28] sm:$0xff]
    %v148 = vld [vmem:[#allocation7 + $0x30] sm:$0xff]
    %v149 = vld [vmem:[#allocation7 + $0x38] sm:$0xff]
    %v150 = vld [vmem:[#allocation7 + $0x40] sm:$0xff]
    %v151 = vld [vmem:[#allocation7 + $0x48] sm:$0xff]
    %v152 = vld [vmem:[#allocation7 + $0x50] sm:$0xff]
    %v153 = vld [vmem:[#allocation7 + $0x58] sm:$0xff]
    %v154 = vld [vmem:[#allocation7 + $0x60] sm:$0xff]
    %v155 = vld [vmem:[#allocation7 + $0x68] sm:$0xff]
    %v156 = vld [vmem:[#allocation7 + $0x70] sm:$0xff]
    %v157 = vld [vmem:[#allocation7 + $0x78] sm:$0xff]
    %158 = vmatprep.subr.mxu0 0.0
    %159 = vmatpush1.msra.mxu0 %v157
    %160 = vmatprep.subr.mxu0 0.0
    %161 = vmatpush1.msra.mxu0 %v156
    %162 = vmatprep.subr.mxu0 0.0
    %163 = vmatpush1.msra.mxu0 %v155
    %164 = vmatprep.subr.mxu0 0.0
    %165 = vmatpush1.msra.mxu0 %v154
    %166 = vmatprep.subr.mxu0 0.0
    %167 = vmatpush1.msra.mxu0 %v153
    %168 = vmatprep.subr.mxu0 0.0
    %169 = vmatpush1.msra.mxu0 %v152
    %170 = vmatprep.subr.mxu0 0.0
    %171 = vmatpush1.msra.mxu0 %v151
    %172 = vmatprep.subr.mxu0 0.0
    %173 = vmatpush1.msra.mxu0 %v150
    %174 = vmatprep.subr.mxu0 0.0
    %175 = vmatpush1.msra.mxu0 %v149
    %176 = vmatprep.subr.mxu0 0.0
    %177 = vmatpush1.msra.mxu0 %v148
    %178 = vmatprep.subr.mxu0 0.0
    %179 = vmatpush1.msra.mxu0 %v147
    %180 = vmatprep.subr.mxu0 0.0
    %181 = vmatpush1.msra.mxu0 %v146
    %182 = vmatprep.subr.mxu0 0.0
    %183 = vmatpush1.msra.mxu0 %v145
    %184 = vmatprep.subr.mxu0 0.0
    %185 = vmatpush1.msra.mxu0 %v144
    %186 = vmatprep.subr.mxu0 0.0
    %187 = vmatpush1.msra.mxu0 %v143
    %188 = vmatprep.subr.mxu0 0.0
    %189 = vmatpush1.msra.mxu0 %v142
    %190 = vmatprep.subr.mxu0 0.0
    %191 = vmatpush2.msra.mxu0 0.0
    %192 = vmatprep.subr.mxu0 0.0
    %193 = vmatpush2.msra.mxu0 0.0
    %194 = vmatprep.subr.mxu0 0.0
    %195 = vmatpush2.msra.mxu0 0.0
    %196 = vmatprep.subr.mxu0 0.0
    %197 = vmatpush2.msra.mxu0 0.0
    %198 = vmatprep.subr.mxu0 0.0
    %199 = vmatpush2.msra.mxu0 0.0
    %200 = vmatprep.subr.mxu0 0.0
    %201 = vmatpush2.msra.mxu0 0.0
    %202 = vmatprep.subr.mxu0 0.0
    %203 = vmatpush2.msra.mxu0 0.0
    %204 = vmatprep.subr.mxu0 0.0
    %205 = vmatpush2.msra.mxu0 0.0
    %206 = vmatprep.subr.mxu0 0.0
    %207 = vmatpush2.msra.mxu0 0.0
    %208 = vmatprep.subr.mxu0 0.0
    %209 = vmatpush2.msra.mxu0 0.0
    %210 = vmatprep.subr.mxu0 0.0
    %211 = vmatpush2.msra.mxu0 0.0
    %212 = vmatprep.subr.mxu0 0.0
    %213 = vmatpush2.msra.mxu0 0.0
    %214 = vmatprep.subr.mxu0 0.0
    %215 = vmatpush2.msra.mxu0 0.0
    %216 = vmatprep.subr.mxu0 0.0
    %217 = vmatpush2.msra.mxu0 0.0
    %218 = vmatprep.subr.mxu0 0.0
    %219 = vmatpush2.msra.mxu0 0.0
    %220 = vmatprep.subr.mxu0 0.0
    %221 = vmatpush2.msra.mxu0 0.0
    %222 = vmatprep.mubr.f32.mxu0 0.0
    %223 = vmatmul.mubr.f32.gmra.mxu0 %v141
    %v224 = vpop.f32.mrf.mxu0
    %v225 = vadd.f32 %v54, %v224
    %v226 = vpop.f32.mrf.mxu0
    %227 = vdwg.mxu0
    %v228 = vmax.f32 %v225, 0.0
    %229 = vst [vmem:[#allocation8] sm:$0xff] %v228
    // Predicated region
    $region26: #{tpu_custom_call.1} parent=1 // pred_check
      _
    $region27: #{tpu_custom_call.1} parent=1 // pred_check_branch
      %231 = sbr.rel (0) target = $region29
    $region28: #{tpu_custom_call.1} parent=1 // pred_region
      %s233 = ssub.s32 128, 128
      %234 = vsyncadd [#allocation4], %s233
      %s236 = sshll.u32 [#allocation8], 4
      %s237 = int_to_ptr.vmem [resolvable:$true] %s236
      %239 = dma.vmem_to_hbm [thread:$0]  %s237, 128, %s3, [#allocation4]
    $region29: #{tpu_custom_call.1} parent=1 // pred_fallthru
      _
    // Predicated region
    $region30: #{tpu_custom_call.1} parent=1 // pred_check
      _
    $region31: #{tpu_custom_call.1} parent=1 // pred_check_branch
      %241 = sbr.rel (0) target = $region33
    $region32: #{tpu_custom_call.1} parent=1 // pred_region
      %242 = dma.done [#allocation4], 128
    $region33: #{tpu_custom_call.1} parent=1 // pred_fallthru
      _
    %243 = vsyncpa [#allocation3], 1
    %244 = vsyncpa [#allocation6], 1
    %245 = vsyncpa [#allocation4], 1

</llo_original>
